<compile_context>
chip_gen: v7x
topology: tpu7x:2x2x1
jax: 0.10.0
libtpu: 0.0.40
codegen_flags: <defaults>
</compile_context>

<pallas_src>
import jax
import jax.numpy as jnp
from jax.experimental import pallas as pl
from jax.experimental.pallas import tpu as pltpu

_NEG = -1e30  # bias value for padded class lanes -> exp() == 0 in softmax


def _round_up(x, m):
    return (x + m - 1) // m * m


def _judgment_kernel(situ_ref, rot_ref, wa_ref, wb_ref, b_ref, pred_ref):
    # Cast activations to bf16 at the MXU boundary (inputs arrive as f32).
    situ = situ_ref[...].astype(jnp.bfloat16)
    rot = rot_ref[...].astype(jnp.bfloat16)

    # Folded head: y = situ @ Wa + rot @ Wb + b_eff   (f32 accumulation)
    y = (
        jnp.dot(situ, wa_ref[...], preferred_element_type=jnp.float32)
        + jnp.dot(rot, wb_ref[...], preferred_element_type=jnp.float32)
        + b_ref[...]
    )

    # Softmax over the (padded) class lanes; pad lanes carry -1e30 -> exp()==0.
    m = jnp.max(y, axis=-1, keepdims=True)
    e = jnp.exp(y - m)
    denom = jnp.sum(e, axis=-1, keepdims=True)
    pred_ref[...] = (e * pl.reciprocal(denom, approx=False)).astype(pred_ref.dtype)


def prepare_head_params(w1, b1, w2, b2):
    """One-time weight prep / layer fold (do at model init, not per forward).

    w1 : [D, 2D]  PyTorch Linear weight (out_features x in_features)
    b1 : [D]
    w2 : [C, D]
    b2 : [C]
    Returns (wa, wb, b_eff, C):
      wa, wb : [D, C_pad] bf16 — folded weight halves for `situation` / `rot`
      b_eff  : [1, C_pad] f32  — folded bias, -1e30 in the padded class lanes
    """
    D = w1.shape[0]
    C = w2.shape[0]
    C_pad = _round_up(C, 128)

    # Fold in f32:  y = x @ W1^T @ W2^T + b1 @ W2^T + b2
    w1_t = jnp.transpose(w1).astype(jnp.float32)            # [2D, D]
    w2_t = jnp.transpose(w2).astype(jnp.float32)            # [D, C]
    w_eff = w1_t @ w2_t                                      # [2D, C]
    b_eff = b1.astype(jnp.float32) @ w2_t + b2.astype(jnp.float32)  # [C]

    # Pad classes to a lane-dense 128 and split into the two concat halves.
    w_eff_p = jnp.zeros((2 * D, C_pad), jnp.float32).at[:, :C].set(w_eff)
    wa = w_eff_p[:D, :].astype(jnp.bfloat16)                 # applied to `situation`
    wb = w_eff_p[D:, :].astype(jnp.bfloat16)                 # applied to `rot`
    b_eff_p = jnp.full((1, C_pad), _NEG, jnp.float32).at[0, :C].set(b_eff)
    return (wa, wb, b_eff_p, C)


def redditor_situation_judgment(situation, rot, params, *, block_b=1024):
    """Classifier head of RedditorSituationJudgment.

    situation, rot : [B, D] float32 CLS embeddings
    params         : output of prepare_head_params
    returns pred   : [B, C] softmax probabilities (float32)
    """
    wa, wb, b_eff, C = params
    B, D = situation.shape
    C_pad = wa.shape[1]

    # Batch tile selection:
    #  - B < 16: a single full block (block shape == array shape is always legal).
    #  - B >= 16: multiple-of-8 tile, capped so there are >= 2 grid steps
    #    (feeds both v7x TensorCores); Pallas masks the partial last block, so
    #    no padded copy of the activations is ever materialized.
    if B >= 16:
        tb = min(block_b, _round_up(-(-B // 2), 8))
    else:
        tb = B
    grid = (pl.cdiv(B, tb),)

    act_spec = pl.BlockSpec((tb, D), lambda i: (i, 0))           # streamed blocks
    res = lambda shape: pl.BlockSpec(shape, lambda i: (0, 0))    # VMEM-resident

    pred_pad = pl.pallas_call(
        _judgment_kernel,
        out_shape=jax.ShapeDtypeStruct((B, C_pad), jnp.float32),
        grid=grid,
        in_specs=[
            act_spec,           # situation block (pipelined)
            act_spec,           # rot block
            res((D, C_pad)),    # wa (resident, tiny after fold)
            res((D, C_pad)),    # wb
            res((1, C_pad)),    # b_eff (padded with -1e30)
        ],
        out_specs=pl.BlockSpec((tb, C_pad), lambda i: (i, 0)),
        compiler_params=pltpu.CompilerParams(
            dimension_semantics=("parallel",)),
    )(situation, rot, wa, wb, b_eff)

    return pred_pad[:, :C]


def _reference(situation, rot, w1, b1, w2, b2):
    x = jnp.concatenate([situation, rot], axis=1)
    logits = x @ w1.T + b1
    y = logits @ w2.T + b2
    return jax.nn.softmax(y, axis=-1)


if __name__ == "__main__":
    # Small shapes consistent with the module: batch=2, d_model=32, n_classes=2.
    B, D, C = 2, 32, 2

    key = jax.random.PRNGKey(0)
    k_situ, k_rot, k_w1, k_b1, k_w2, k_b2 = jax.random.split(key, 6)

    # "Encoder outputs" (CLS embeddings) — the DistilBERT encode_model itself is
    # not translated; embeddings are synthesized as kernel inputs.
    situation = jax.random.normal(k_situ, (B, D), dtype=jnp.float32)
    rot = jax.random.normal(k_rot, (B, D), dtype=jnp.float32)

    # Deterministic Linear parameters (PyTorch-style uniform(-1/sqrt(fan_in), ..)).
    bound1 = 1.0 / jnp.sqrt(2.0 * D)
    w1 = jax.random.uniform(k_w1, (D, 2 * D), jnp.float32, -bound1, bound1)
    b1 = jax.random.uniform(k_b1, (D,), jnp.float32, -bound1, bound1)
    bound2 = 1.0 / jnp.sqrt(float(D))
    w2 = jax.random.uniform(k_w2, (C, D), jnp.float32, -bound2, bound2)
    b2 = jax.random.uniform(k_b2, (C,), jnp.float32, -bound2, bound2)

    # One-time weight prep / layer fold (init-time), then the forward call.
    params = prepare_head_params(w1, b1, w2, b2)
    pred = redditor_situation_judgment(situation, rot, params)
    pred = jax.block_until_ready(pred)

    ref = _reference(situation, rot, w1, b1, w2, b2)
    assert pred.shape == (B, C)
    # bf16 MXU inputs / folded bf16 weights (f32 accumulation) vs f32 reference.
    assert jnp.allclose(pred, ref, atol=2e-2, rtol=2e-2)
    # softmax rows must still sum to 1 (pad lanes contribute exp(-1e30) == 0).
    assert jnp.allclose(jnp.sum(pred, axis=-1), 1.0, atol=1e-3)

    print("KERNEL_OK")
</pallas_src>

<mosaic_0001>
module attributes {stable_mosaic.version = 11 : i64} {
  func.func @_judgment_kernel(%arg0: i32, %arg1: memref<2x32xf32, #tpu.memory_space<vmem>>, %arg2: memref<2x32xf32, #tpu.memory_space<vmem>>, %arg3: memref<32x128xbf16, #tpu.memory_space<vmem>>, %arg4: memref<32x128xbf16, #tpu.memory_space<vmem>>, %arg5: memref<1x128xf32, #tpu.memory_space<vmem>>, %arg6: memref<2x128xf32, #tpu.memory_space<vmem>>) attributes {dimension_semantics = [#tpu.dimension_semantics<parallel>], iteration_bounds = array<i64: 1>, scalar_prefetch = 0 : i64, scratch_operands = 0 : i64, tpu.core_type = #tpu.core_type<tc>, window_params = [{transform_indices = @transform_0, window_bounds = array<i64: 2, 32>}, {transform_indices = @transform_1, window_bounds = array<i64: 2, 32>}, {pipeline_mode = #tpu.pipeline_mode<synchronous>, transform_indices = @transform_2, window_bounds = array<i64: 32, 128>}, {pipeline_mode = #tpu.pipeline_mode<synchronous>, transform_indices = @transform_3, window_bounds = array<i64: 32, 128>}, {pipeline_mode = #tpu.pipeline_mode<synchronous>, transform_indices = @transform_4, window_bounds = array<i64: 1, 128>}, {transform_indices = @transform_5, window_bounds = array<i64: 2, 128>}]} {
    %c0 = arith.constant 0 : index
    %c0_0 = arith.constant 0 : index
    %0 = vector.load %arg1[%c0, %c0_0] : memref<2x32xf32, #tpu.memory_space<vmem>>, vector<2x32xf32>
    %1 = arith.truncf %0 : vector<2x32xf32> to vector<2x32xbf16>
    %c0_1 = arith.constant 0 : index
    %c0_2 = arith.constant 0 : index
    %2 = vector.load %arg2[%c0_1, %c0_2] : memref<2x32xf32, #tpu.memory_space<vmem>>, vector<2x32xf32>
    %3 = arith.truncf %2 : vector<2x32xf32> to vector<2x32xbf16>
    %c0_3 = arith.constant 0 : index
    %c0_4 = arith.constant 0 : index
    %4 = vector.load %arg3[%c0_3, %c0_4] : memref<32x128xbf16, #tpu.memory_space<vmem>>, vector<32x128xbf16>
    %cst = arith.constant dense<0.000000e+00> : vector<2x128xf32>
    %5 = tpu.matmul %1, %4, %cst {dimension_numbers = #tpu.dot_dimension_numbers<[1], [0], [0], [1], [0, 0, 1, 1], [], []>} : vector<2x32xbf16>, vector<32x128xbf16>, vector<2x128xf32> -> vector<2x128xf32>
    %c0_5 = arith.constant 0 : index
    %c0_6 = arith.constant 0 : index
    %6 = vector.load %arg4[%c0_5, %c0_6] : memref<32x128xbf16, #tpu.memory_space<vmem>>, vector<32x128xbf16>
    %cst_7 = arith.constant dense<0.000000e+00> : vector<2x128xf32>
    %7 = tpu.matmul %3, %6, %cst_7 {dimension_numbers = #tpu.dot_dimension_numbers<[1], [0], [0], [1], [0, 0, 1, 1], [], []>} : vector<2x32xbf16>, vector<32x128xbf16>, vector<2x128xf32> -> vector<2x128xf32>
    %8 = arith.addf %5, %7 : vector<2x128xf32>
    %c0_8 = arith.constant 0 : index
    %c0_9 = arith.constant 0 : index
    %9 = vector.load %arg5[%c0_8, %c0_9] : memref<1x128xf32, #tpu.memory_space<vmem>>, vector<1x128xf32>
    %10 = vector.broadcast %9 : vector<1x128xf32> to vector<2x128xf32>
    %11 = arith.addf %8, %10 : vector<2x128xf32>
    %cst_10 = arith.constant dense<0xFF800000> : vector<2xf32>
    %12 = vector.multi_reduction <maximumf>, %11, %cst_10 [1] : vector<2x128xf32> to vector<2xf32>
    %13 = vector.shape_cast %12 : vector<2xf32> to vector<2x1xf32>
    %14 = vector.broadcast %13 : vector<2x1xf32> to vector<2x128xf32>
    %15 = arith.subf %11, %14 : vector<2x128xf32>
    %16 = math.exp %15 : vector<2x128xf32>
    %cst_11 = arith.constant dense<0.000000e+00> : vector<2xf32>
    %17 = vector.multi_reduction <add>, %16, %cst_11 [1] : vector<2x128xf32> to vector<2xf32>
    %18 = vector.shape_cast %17 : vector<2xf32> to vector<2x1xf32>
    %19 = tpu.reciprocal %18 : vector<2x1xf32> -> vector<2x1xf32>
    %20 = vector.broadcast %19 : vector<2x1xf32> to vector<2x128xf32>
    %21 = arith.mulf %16, %20 : vector<2x128xf32>
    %c0_12 = arith.constant 0 : index
    %c0_13 = arith.constant 0 : index
    %22 = vector.load %arg6[%c0_12, %c0_13] : memref<2x128xf32, #tpu.memory_space<vmem>>, vector<2x128xf32>
    tpu.vector_store %arg6[%c0_12, %c0_13], %21 {strides = array<i32>} : memref<2x128xf32, #tpu.memory_space<vmem>>, vector<2x128xf32>,
    return
  }
  func.func @transform_0(%arg0: i32) -> (i32, i32) {
    %c0_i32 = arith.constant 0 : i32
    %c0_i32_0 = arith.constant 0 : i32
    return %arg0, %c0_i32 : i32, i32
  }
  func.func @transform_1(%arg0: i32) -> (i32, i32) {
    %c0_i32 = arith.constant 0 : i32
    %c0_i32_0 = arith.constant 0 : i32
    return %arg0, %c0_i32 : i32, i32
  }
  func.func @transform_2(%arg0: i32) -> (i32, i32) {
    %c0_i32 = arith.constant 0 : i32
    %c0_i32_0 = arith.constant 0 : i32
    %c0_i32_1 = arith.constant 0 : i32
    return %c0_i32, %c0_i32_0 : i32, i32
  }
  func.func @transform_3(%arg0: i32) -> (i32, i32) {
    %c0_i32 = arith.constant 0 : i32
    %c0_i32_0 = arith.constant 0 : i32
    %c0_i32_1 = arith.constant 0 : i32
    return %c0_i32, %c0_i32_0 : i32, i32
  }
  func.func @transform_4(%arg0: i32) -> (i32, i32) {
    %c0_i32 = arith.constant 0 : i32
    %c0_i32_0 = arith.constant 0 : i32
    %c0_i32_1 = arith.constant 0 : i32
    return %c0_i32, %c0_i32_0 : i32, i32
  }
  func.func @transform_5(%arg0: i32) -> (i32, i32) {
    %c0_i32 = arith.constant 0 : i32
    %c0_i32_0 = arith.constant 0 : i32
    return %arg0, %c0_i32 : i32, i32
  }
}

</mosaic_0001>

<llo_original>
// kernel: tpu_custom_call.1
$region0: #{tpu_custom_call.1}
  #allocation0 [shape = 'u32[]', space=smem, size = 0x4, offset = 0x4, fixed_abs, tag = 'smem constant byte address 0x4 - core index']
  #allocation1 [shape = 'u32[144,128]{1,0:T(1,128)}', space=vmem, size = 0x12000, scoped, tag = 'internal scratch']
  %s0 = inlined_call_operand.hbm [shape: f32[2,32], index: 0, kind: input, shape index: {}]
  %s1 = inlined_call_operand.vmem [shape: f32[2,32], index: 1, kind: input, shape index: {}]
  %s2 = inlined_call_operand.hbm [shape: bf16[32,128], index: 2, kind: input, shape index: {}]
  %s3 = inlined_call_operand.hbm [shape: bf16[32,128], index: 3, kind: input, shape index: {}]
  %s4 = inlined_call_operand.vmem [shape: f32[1,128], index: 4, kind: input, shape index: {}]
  %s5 = inlined_call_operand.hbm [shape: f32[2,128], index: 5, kind: output, shape index: {}]
  %s6 = sld [smem:[#allocation0]]
  $region42: #{tpu_custom_call.1} parent=0
    _
  %s8 = ssub.s32 1, %s6
  %s9 = scalar_select 0, %s8, %s6
  $region1: #{tpu_custom_call.1} parent=0
    #allocation2 [shape = 'u8[1024]{0}', space=vmem, size = 0x400, scoped, tag = 'input window, operand 0, single buffered']
    #allocation3 [shape = 's32[1]{0}', space=sflag, size = 0x4, scoped, tag = 'scoped memory for tpu_custom_call.1']
    #allocation4 [shape = 's32[1]{0}', space=sflag, size = 0x4, scoped, tag = 'scoped memory for tpu_custom_call.1']
    #allocation5 [shape = 'u8[8192]{0}', space=vmem, size = 0x2000, scoped, tag = 'input window, operand 2, single buffered']
    #allocation6 [shape = 's32[1]{0}', space=sflag, size = 0x4, scoped, tag = 'scoped memory for tpu_custom_call.1']
    #allocation7 [shape = 'u8[8192]{0}', space=vmem, size = 0x2000, scoped, tag = 'input window, operand 3, single buffered']
    #allocation8 [shape = 'u8[1024]{0}', space=vmem, size = 0x400, scoped, tag = 'output window, operand 0, single buffered']
    %10 = vsyncpa [#allocation3], 0
    %11 = vsyncpa [#allocation6], 0
    %12 = vsyncpa [#allocation4], 0
    // Predicated region
    $region2: #{tpu_custom_call.1} parent=1 // pred_check
      _
    $region3: #{tpu_custom_call.1} parent=1 // pred_check_branch
      %14 = sbr.rel (0) target = $region5
    $region4: #{tpu_custom_call.1} parent=1 // pred_region
      %s16 = ssub.s32 32, 32
      %17 = vsyncadd [#allocation3], %s16
      %s19 = sshll.u32 [#allocation2], 4
      %s20 = int_to_ptr.vmem [resolvable:$true] %s19
      %22 = dma.hbm_to_vmem [thread:$0]  %s0, 32, %s20, [#allocation3]
    $region5: #{tpu_custom_call.1} parent=1 // pred_fallthru
      _
    // Predicated region
    $region6: #{tpu_custom_call.1} parent=1 // pred_check
      _
    $region7: #{tpu_custom_call.1} parent=1 // pred_check_branch
      %24 = sbr.rel (0) target = $region9
    $region8: #{tpu_custom_call.1} parent=1 // pred_region
      _
    $region9: #{tpu_custom_call.1} parent=1 // pred_fallthru
      _
    // Predicated region
    $region10: #{tpu_custom_call.1} parent=1 // pred_check
      _
    $region11: #{tpu_custom_call.1} parent=1 // pred_check_branch
      %26 = sbr.rel (0) target = $region13
    $region12: #{tpu_custom_call.1} parent=1 // pred_region
      %s28 = ssub.s32 256, 256
      %29 = vsyncadd [#allocation6], %s28
      %s30 = sshll.u32 [#allocation5], 4
      %s31 = int_to_ptr.vmem [resolvable:$true] %s30
      %36 = dma.hbm_to_vmem [thread:$0]  %s2, 256, %s31, [#allocation6], 64, 64, 4
    $region13: #{tpu_custom_call.1} parent=1 // pred_fallthru
      _
    // Predicated region
    $region14: #{tpu_custom_call.1} parent=1 // pred_check
      _
    $region15: #{tpu_custom_call.1} parent=1 // pred_check_branch
      %38 = sbr.rel (0) target = $region17
    $region16: #{tpu_custom_call.1} parent=1 // pred_region
      %s40 = ssub.s32 256, 256
      %41 = vsyncadd [#allocation6], %s40
      %s42 = sshll.u32 [#allocation7], 4
      %s43 = int_to_ptr.vmem [resolvable:$true] %s42
      %48 = dma.hbm_to_vmem [thread:$0]  %s3, 256, %s43, [#allocation6], 64, 64, 4
    $region17: #{tpu_custom_call.1} parent=1 // pred_fallthru
      _
    // Predicated region
    $region18: #{tpu_custom_call.1} parent=1 // pred_check
      _
    $region19: #{tpu_custom_call.1} parent=1 // pred_check_branch
      %50 = sbr.rel (0) target = $region21
    $region20: #{tpu_custom_call.1} parent=1 // pred_region
      _
    $region21: #{tpu_custom_call.1} parent=1 // pred_fallthru
      _
    // Predicated region
    $region22: #{tpu_custom_call.1} parent=1 // pred_check
      _
    $region23: #{tpu_custom_call.1} parent=1 // pred_check_branch
      %52 = sbr.rel (0) target = $region25
    $region24: #{tpu_custom_call.1} parent=1 // pred_region
      %53 = dma.done [#allocation3], 32
    $region25: #{tpu_custom_call.1} parent=1 // pred_fallthru
      _
    // Predicated region
    $region26: #{tpu_custom_call.1} parent=1 // pred_check
      _
    $region27: #{tpu_custom_call.1} parent=1 // pred_check_branch
      %55 = sbr.rel (0) target = $region29
    $region28: #{tpu_custom_call.1} parent=1 // pred_region
      %56 = dma.done [#allocation6], 256
    $region29: #{tpu_custom_call.1} parent=1 // pred_fallthru
      _
    // Predicated region
    $region30: #{tpu_custom_call.1} parent=1 // pred_check
      _
    $region31: #{tpu_custom_call.1} parent=1 // pred_check_branch
      %58 = sbr.rel (0) target = $region33
    $region32: #{tpu_custom_call.1} parent=1 // pred_region
      %59 = dma.done [#allocation6], 256
    $region33: #{tpu_custom_call.1} parent=1 // pred_fallthru
      _
    %v61 = vld [vmem:[#allocation2] sm:$0x3]
    %v62 = vpack.c.bf16 %v61, %v61
    %v63 = vld [vmem:[%s1] sm:$0x3]
    %v64 = vpack.c.bf16 %v63, %v63
    %v65 = vld [vmem:[#allocation5] sm:$0xf]
    %v66 = vld [vmem:[#allocation5 + $0x4] sm:$0xf]
    %v67 = vld [vmem:[#allocation5 + $0x8] sm:$0xf]
    %v68 = vld [vmem:[#allocation5 + $0xc] sm:$0xf]
    %v69 = vld [vmem:[#allocation7] sm:$0xf]
    %v70 = vld [vmem:[#allocation7 + $0x4] sm:$0xf]
    %v71 = vld [vmem:[#allocation7 + $0x8] sm:$0xf]
    %v72 = vld [vmem:[#allocation7 + $0xc] sm:$0xf]
    %v77 = vunpack.c.l.b16 %v69
    %v78 = vunpack.c.l.b16 %v70
    %v79 = vunpack.c.l.b16 %v71
    %v80 = vunpack.c.l.b16 %v72
    %v81 = vpack.c.b16 %v78, %v77
    %v82 = vpack.c.b16 %v80, %v79
    %vm85 = vcmask 261120
    %v87 = vsel %vm85, %v64, 0
    %89 = vmatprep.subr.bf16.mxu0 0
    %90 = vmatpush1.bf16.msra.mxu0 %v81
    %91 = vmatprep.subr.bf16.mxu0 0
    %92 = vmatpush1.bf16.msra.mxu0 %v82
    %93 = vmatprep.subr.bf16.mxu0 0
    %94 = vmatpush1.bf16.msra.mxu0 0
    %95 = vmatprep.subr.bf16.mxu0 0
    %96 = vmatpush1.bf16.msra.mxu0 0
    %97 = vmatprep.subr.bf16.mxu0 0
    %98 = vmatpush1.bf16.msra.mxu0 0
    %99 = vmatprep.subr.bf16.mxu0 0
    %100 = vmatpush1.bf16.msra.mxu0 0
    %101 = vmatprep.subr.bf16.mxu0 0
    %102 = vmatpush1.bf16.msra.mxu0 0
    %103 = vmatprep.subr.bf16.mxu0 0
    %104 = vmatpush1.bf16.msra.mxu0 0
    %105 = vmatprep.subr.bf16.mxu0 0
    %106 = vmatpush1.bf16.msra.mxu0 0
    %107 = vmatprep.subr.bf16.mxu0 0
    %108 = vmatpush1.bf16.msra.mxu0 0
    %109 = vmatprep.subr.bf16.mxu0 0
    %110 = vmatpush1.bf16.msra.mxu0 0
    %111 = vmatprep.subr.bf16.mxu0 0
    %112 = vmatpush1.bf16.msra.mxu0 0
    %113 = vmatprep.subr.bf16.mxu0 0
    %114 = vmatpush1.bf16.msra.mxu0 0
    %115 = vmatprep.subr.bf16.mxu0 0
    %116 = vmatpush1.bf16.msra.mxu0 0
    %117 = vmatprep.subr.bf16.mxu0 0
    %118 = vmatpush1.bf16.msra.mxu0 0
    %119 = vmatprep.subr.bf16.mxu0 0
    %120 = vmatpush1.bf16.msra.mxu0 0
    %121 = vmatprep.mubr.bf16.mxu0 0
    %122 = vmatmul.mubr.bf16.gmra.mrb[0].mxu0 %v87
    %v123 = vpop.f32.mrb[0].mxu0
    %v124 = vadd.f32 0.0, %v123
    %v125 = vpop.f32.mrb[0].mxu0
    %v126 = vpop.f32.mrb[0].mxu0
    %v127 = vpop.f32.mrb[0].mxu0
    %128 = vdwg.mxu0
    %v133 = vunpack.c.l.b16 %v65
    %v134 = vunpack.c.l.b16 %v66
    %v135 = vunpack.c.l.b16 %v67
    %v136 = vunpack.c.l.b16 %v68
    %v137 = vpack.c.b16 %v134, %v133
    %v138 = vpack.c.b16 %v136, %v135
    %v142 = vsel %vm85, %v62, 0
    %144 = vmatprep.subr.bf16.mxu0 0
    %145 = vmatpush1.bf16.msra.mxu0 %v137
    %146 = vmatprep.subr.bf16.mxu0 0
    %147 = vmatpush1.bf16.msra.mxu0 %v138
    %148 = vmatprep.subr.bf16.mxu0 0
    %149 = vmatpush1.bf16.msra.mxu0 0
    %150 = vmatprep.subr.bf16.mxu0 0
    %151 = vmatpush1.bf16.msra.mxu0 0
    %152 = vmatprep.subr.bf16.mxu0 0
    %153 = vmatpush1.bf16.msra.mxu0 0
    %154 = vmatprep.subr.bf16.mxu0 0
    %155 = vmatpush1.bf16.msra.mxu0 0
    %156 = vmatprep.subr.bf16.mxu0 0
    %157 = vmatpush1.bf16.msra.mxu0 0
    %158 = vmatprep.subr.bf16.mxu0 0
    %159 = vmatpush1.bf16.msra.mxu0 0
    %160 = vmatprep.subr.bf16.mxu0 0
    %161 = vmatpush1.bf16.msra.mxu0 0
    %162 = vmatprep.subr.bf16.mxu0 0
    %163 = vmatpush1.bf16.msra.mxu0 0
    %164 = vmatprep.subr.bf16.mxu0 0
    %165 = vmatpush1.bf16.msra.mxu0 0
    %166 = vmatprep.subr.bf16.mxu0 0
    %167 = vmatpush1.bf16.msra.mxu0 0
    %168 = vmatprep.subr.bf16.mxu0 0
    %169 = vmatpush1.bf16.msra.mxu0 0
    %170 = vmatprep.subr.bf16.mxu0 0
    %171 = vmatpush1.bf16.msra.mxu0 0
    %172 = vmatprep.subr.bf16.mxu0 0
    %173 = vmatpush1.bf16.msra.mxu0 0
    %174 = vmatprep.subr.bf16.mxu0 0
    %175 = vmatpush1.bf16.msra.mxu0 0
    %176 = vmatprep.mubr.bf16.mxu0 0
    %177 = vmatmul.mubr.bf16.gmra.mrb[0].mxu0 %v142
    %v178 = vpop.f32.mrb[0].mxu0
    %v179 = vadd.f32 %v124, %v178
    %v180 = vpop.f32.mrb[0].mxu0
    %v181 = vpop.f32.mrb[0].mxu0
    %v182 = vpop.f32.mrb[0].mxu0
    %183 = vdwg.mxu0
    %v184 = vld [vmem:[%s4] sm:$0x1]
    %v186 = vlaneseq
    %v187 = vshrl.u32 %v186, 7
    %v188 = vsub.s32 0, %v187
    %v189 = vrot.slane %v184, %v188
    %v191 = vadd.f32 %v179, %v189
    %vm192 = vcmask 1041408
    %v193 = vsel %vm192, %v191, -inf
    %194 = vmax.xlane.f32.xlu0 %v193
    %v195 = vpop.xlane.xlu0 %194
    %v196 = vsub.f32 %v191, %v195
    %v197 = vmul.f32 %v196, 1.442695
    %v198 = vpow.pop %v197
    %v199 = vsel %vm192, %v198, 0.0
    %200 = vadd.xlane.f32.xlu0 %v199
    %v201 = vpop.xlane.xlu0 %200
    %v202 = vrcp.pop %v201
    %v203 = vmul.f32 %v198, %v202
    %204 = vst [vmem:[#allocation8] sm:$0x3] %v203
    // Predicated region
    $region34: #{tpu_custom_call.1} parent=1 // pred_check
      _
    $region35: #{tpu_custom_call.1} parent=1 // pred_check_branch
      %206 = sbr.rel (0) target = $region37
    $region36: #{tpu_custom_call.1} parent=1 // pred_region
      %s208 = ssub.s32 32, 32
      %209 = vsyncadd [#allocation4], %s208
      %s211 = sshll.u32 [#allocation8], 4
      %s212 = int_to_ptr.vmem [resolvable:$true] %s211
      %214 = dma.vmem_to_hbm [thread:$0]  %s212, 32, %s5, [#allocation4]
    $region37: #{tpu_custom_call.1} parent=1 // pred_fallthru
      _
    // Predicated region
    $region38: #{tpu_custom_call.1} parent=1 // pred_check
      _
    $region39: #{tpu_custom_call.1} parent=1 // pred_check_branch
      %216 = sbr.rel (0) target = $region41
    $region40: #{tpu_custom_call.1} parent=1 // pred_region
      %217 = dma.done [#allocation4], 32
    $region41: #{tpu_custom_call.1} parent=1 // pred_fallthru
      _
    %218 = vsyncpa [#allocation3], 1
    %219 = vsyncpa [#allocation6], 1
    %220 = vsyncpa [#allocation4], 1

</llo_original>
